<compile_context>
chip_gen: v6e
topology: v6e:2x2x1
jax: 0.10.0
libtpu: 0.0.40
codegen_flags: <defaults>
</compile_context>

<pallas_src>
import functools

import jax
import jax.numpy as jnp
from jax.experimental import pallas as pl
from jax.experimental.pallas import tpu as pltpu


def _round_up(x, m):
    return (x + m - 1) // m * m


def _classifier_kernel(x_ref, w_ref, b_ref, o_ref):
    # x_ref : (TM, Dp)   activation tile
    # w_ref : (Dp, Np)   classifier weight, pre-transposed + zero-padded
    # b_ref : (1,  Np)   classifier bias, zero-padded
    # o_ref : (TM, Np)   logits tile (lane-dense, Np % 128 == 0)
    acc = jnp.dot(x_ref[...], w_ref[...], preferred_element_type=jnp.float32)
    o_ref[...] = (acc + b_ref[...].astype(jnp.float32)).astype(o_ref.dtype)


def prepare_classifier_params(weight, bias):
    """One-time (init) prep: transpose weight to (D, N) and pad D, N to 128.

    weight: (n_class, d_model), bias: (n_class,)  ->  (D_pad, N_pad), (1, N_pad)
    Doing this once keeps the per-call path free of transposes and guarantees
    the contraction axis is lane-contiguous for the MXU feed.
    """
    n_class, d_model = weight.shape
    d_pad = _round_up(d_model, 128)
    n_pad = _round_up(n_class, 128)
    w_t = jnp.zeros((d_pad, n_pad), weight.dtype).at[:d_model, :n_class].set(weight.T)
    b2d = jnp.zeros((1, n_pad), bias.dtype).at[0, :n_class].set(bias)
    return w_t, b2d


@functools.partial(jax.jit, static_argnames=("n_class",))
def classification_head(dec_out, w_padded, b_padded, *, n_class):
    """dec_out: (B, T, D); w_padded: (D_pad, N_pad); b_padded: (1, N_pad)."""
    B, T, D = dec_out.shape
    Dp, Np = w_padded.shape
    M = B * T
    dtype = dec_out.dtype
    x_bytes = jnp.dtype(dtype).itemsize
    w_bytes = jnp.dtype(w_padded.dtype).itemsize

    # --- pick TM (rows per tile) against a conservative VMEM budget ---------
    # Resident: weight + bias (single copy) + double-buffered X tile + double-
    # buffered output tile.  24 MiB budget fits v5e/v6e/v7x scoped VMEM once
    # vmem_limit_bytes is raised below.
    vmem_budget = 24 * 1024 * 1024
    fixed = (Dp * Np + Np) * w_bytes
    per_row = 2 * (Dp * x_bytes + Np * x_bytes)
    tm = (vmem_budget - fixed) // per_row
    tm = max(8, min(512, (tm // 8) * 8))        # 8-row aligned, cap at 512
    tm = min(tm, _round_up(M, 8))               # don't overshoot small inputs

    Mp = _round_up(M, tm)

    # --- pad activations to (Mp, Dp) -----------------------------------------
    x2d = dec_out.reshape(M, D)
    if Mp != M or Dp != D:
        x2d = jnp.zeros((Mp, Dp), dtype).at[:M, :D].set(x2d)

    out = pl.pallas_call(
        _classifier_kernel,
        out_shape=jax.ShapeDtypeStruct((Mp, Np), dtype),
        grid_spec=pltpu.PrefetchScalarGridSpec(
            num_scalar_prefetch=0,
            grid=(Mp // tm,),
            in_specs=[
                pl.BlockSpec((tm, Dp), lambda i: (i, 0)),   # stream X tiles
                pl.BlockSpec((Dp, Np), lambda i: (0, 0)),   # weight resident
                pl.BlockSpec((1, Np), lambda i: (0, 0)),    # bias resident
            ],
            out_specs=pl.BlockSpec((tm, Np), lambda i: (i, 0)),
        ),
        compiler_params=pltpu.CompilerParams(
            dimension_semantics=("parallel",),      # shardable across TCs (v7x)
            vmem_limit_bytes=40 * 1024 * 1024,
        ),
    )(x2d, w_padded, b_padded)

    return out[:M, :n_class].reshape(B, T, n_class)


def _gpt_standin(x, key, d_model):
    """Deterministic stand-in for the external `gpt` decoder.

    Maps integer token ids (B, T) to float features (B, T, d_model) via a
    fixed random embedding table (plain JAX glue; not the hot path)."""
    vocab = 64
    emb = jax.random.normal(key, (vocab, d_model), dtype=jnp.float32) * 0.02
    return emb[x]


if __name__ == "__main__":
    key = jax.random.PRNGKey(0)
    k_tok, k_gpt, k_w, k_b = jax.random.split(key, 4)

    # Small config consistent with the module: d_model hidden size, n_class labels.
    B, T, d_model, n_class = 2, 8, 32, 8

    # Example input: token ids, as a GPT would consume.
    x_tokens = jax.random.randint(k_tok, (B, T), 0, 64)

    # "gpt(x)" -> decoder output features.
    dec_out = _gpt_standin(x_tokens, k_gpt, d_model)          # (B, T, d_model)

    # Classifier params, deterministic init matching nn.Linear + normal_(std=0.02).
    weight = jax.random.normal(k_w, (n_class, d_model), dtype=jnp.float32) * 0.02
    bound = 1.0 / jnp.sqrt(jnp.float32(d_model))
    bias = jax.random.uniform(k_b, (n_class,), dtype=jnp.float32,
                              minval=-bound, maxval=bound)

    # One-time parameter prep (transpose + lane-pad), then the kernel call.
    w_padded, b_padded = prepare_classifier_params(weight, bias)
    logits = classification_head(dec_out, w_padded, b_padded, n_class=n_class)
    logits = jax.block_until_ready(logits)

    # Reference check (plain JAX).
    ref = dec_out @ weight.T + bias
    assert logits.shape == (B, T, n_class)
    assert jnp.allclose(logits, ref, atol=1e-5, rtol=1e-5)

    print("KERNEL_OK")
</pallas_src>

<mosaic_0001>
module attributes {stable_mosaic.version = 11 : i64} {
  func.func @_classifier_kernel(%arg0: i32, %arg1: memref<16x128xf32, #tpu.memory_space<vmem>>, %arg2: memref<128x128xf32, #tpu.memory_space<vmem>>, %arg3: memref<1x128xf32, #tpu.memory_space<vmem>>, %arg4: memref<16x128xf32, #tpu.memory_space<vmem>>) attributes {dimension_semantics = [#tpu.dimension_semantics<parallel>], iteration_bounds = array<i64: 1>, scalar_prefetch = 0 : i64, scratch_operands = 0 : i64, tpu.core_type = #tpu.core_type<tc>, window_params = [{transform_indices = @transform_0, window_bounds = array<i64: 16, 128>}, {pipeline_mode = #tpu.pipeline_mode<synchronous>, transform_indices = @transform_1, window_bounds = array<i64: 128, 128>}, {pipeline_mode = #tpu.pipeline_mode<synchronous>, transform_indices = @transform_2, window_bounds = array<i64: 1, 128>}, {transform_indices = @transform_3, window_bounds = array<i64: 16, 128>}]} {
    %c0 = arith.constant 0 : index
    %c0_0 = arith.constant 0 : index
    %0 = vector.load %arg1[%c0, %c0_0] : memref<16x128xf32, #tpu.memory_space<vmem>>, vector<16x128xf32>
    %c0_1 = arith.constant 0 : index
    %c0_2 = arith.constant 0 : index
    %1 = vector.load %arg2[%c0_1, %c0_2] : memref<128x128xf32, #tpu.memory_space<vmem>>, vector<128x128xf32>
    %cst = arith.constant dense<0.000000e+00> : vector<16x128xf32>
    %2 = tpu.matmul %0, %1, %cst {dimension_numbers = #tpu.dot_dimension_numbers<[1], [0], [0], [1], [0, 0, 1, 1], [], []>} : vector<16x128xf32>, vector<128x128xf32>, vector<16x128xf32> -> vector<16x128xf32>
    %c0_3 = arith.constant 0 : index
    %c0_4 = arith.constant 0 : index
    %3 = vector.load %arg3[%c0_3, %c0_4] : memref<1x128xf32, #tpu.memory_space<vmem>>, vector<1x128xf32>
    %4 = vector.broadcast %3 : vector<1x128xf32> to vector<16x128xf32>
    %5 = arith.addf %2, %4 : vector<16x128xf32>
    %c0_5 = arith.constant 0 : index
    %c0_6 = arith.constant 0 : index
    %6 = vector.load %arg4[%c0_5, %c0_6] : memref<16x128xf32, #tpu.memory_space<vmem>>, vector<16x128xf32>
    tpu.vector_store %arg4[%c0_5, %c0_6], %5 {strides = array<i32>} : memref<16x128xf32, #tpu.memory_space<vmem>>, vector<16x128xf32>,
    return
  }
  func.func @transform_0(%arg0: i32) -> (i32, i32) {
    %c0_i32 = arith.constant 0 : i32
    %c0_i32_0 = arith.constant 0 : i32
    return %arg0, %c0_i32 : i32, i32
  }
  func.func @transform_1(%arg0: i32) -> (i32, i32) {
    %c0_i32 = arith.constant 0 : i32
    %c0_i32_0 = arith.constant 0 : i32
    %c0_i32_1 = arith.constant 0 : i32
    return %c0_i32, %c0_i32_0 : i32, i32
  }
  func.func @transform_2(%arg0: i32) -> (i32, i32) {
    %c0_i32 = arith.constant 0 : i32
    %c0_i32_0 = arith.constant 0 : i32
    %c0_i32_1 = arith.constant 0 : i32
    return %c0_i32, %c0_i32_0 : i32, i32
  }
  func.func @transform_3(%arg0: i32) -> (i32, i32) {
    %c0_i32 = arith.constant 0 : i32
    %c0_i32_0 = arith.constant 0 : i32
    return %arg0, %c0_i32 : i32, i32
  }
}

</mosaic_0001>

<llo_original>
// kernel: classification_head.1
$region0: #{classification_head.1}
  #allocation0 [shape = 'u32[]', space=smem, size = 0x4, offset = 0x4, fixed_abs, tag = 'smem constant byte address 0x4 - core index']
  #allocation1 [shape = 'u32[144,128]{1,0:T(1,128)}', space=vmem, size = 0x12000, scoped, tag = 'internal scratch']
  %s0 = inlined_call_operand.vmem [shape: f32[16,128], index: 0, kind: input, shape index: {}]
  %s1 = inlined_call_operand.hbm [shape: f32[128,128], index: 1, kind: input, shape index: {}]
  %s2 = inlined_call_operand.vmem [shape: f32[1,128], index: 2, kind: input, shape index: {}]
  %s3 = inlined_call_operand.vmem [shape: f32[16,128], index: 3, kind: output, shape index: {}]
  %s4 = sld [smem:[#allocation0]]
  $region26: #{classification_head.1} parent=0
    _
  %s6 = ssub.s32 1, %s4
  %s7 = scalar_select 0, %s6, %s4
  $region1: #{classification_head.1} parent=0
    #allocation2 [shape = 'u8[65536]{0}', space=vmem, size = 0x10000, scoped, tag = 'input window, operand 1, single buffered']
    #allocation3 [shape = 's32[1]{0}', space=sflag, size = 0x4, scoped, tag = 'scoped memory for classification_head.1']
    %8 = vsyncpa [#allocation3], 0
    // Predicated region
    $region2: #{classification_head.1} parent=1 // pred_check
      _
    $region3: #{classification_head.1} parent=1 // pred_check_branch
      %10 = sbr.rel (0) target = $region5
    $region4: #{classification_head.1} parent=1 // pred_region
      _
    $region5: #{classification_head.1} parent=1 // pred_fallthru
      _
    // Predicated region
    $region6: #{classification_head.1} parent=1 // pred_check
      _
    $region7: #{classification_head.1} parent=1 // pred_check_branch
      %12 = sbr.rel (0) target = $region9
    $region8: #{classification_head.1} parent=1 // pred_region
      %s14 = ssub.s32 2048, 2048
      %15 = vsyncadd [#allocation3], %s14
      %s16 = sshll.u32 [#allocation2], 4
      %s17 = int_to_ptr.vmem [resolvable:$true] %s16
      %22 = dma.hbm_to_vmem [thread:$0]  %s1, 2048, %s17, [#allocation3], 128, 128, 8
    $region9: #{classification_head.1} parent=1 // pred_fallthru
      _
    // Predicated region
    $region10: #{classification_head.1} parent=1 // pred_check
      _
    $region11: #{classification_head.1} parent=1 // pred_check_branch
      %24 = sbr.rel (0) target = $region13
    $region12: #{classification_head.1} parent=1 // pred_region
      _
    $region13: #{classification_head.1} parent=1 // pred_fallthru
      _
    // Predicated region
    $region14: #{classification_head.1} parent=1 // pred_check
      _
    $region15: #{classification_head.1} parent=1 // pred_check_branch
      %26 = sbr.rel (0) target = $region17
    $region16: #{classification_head.1} parent=1 // pred_region
      %27 = dma.done [#allocation3], 2048
    $region17: #{classification_head.1} parent=1 // pred_fallthru
      _
    %v28 = vld [vmem:[%s0] sm:$0xff]
    %v29 = vld [vmem:[%s0 + $0x8] sm:$0xff]
    %v30 = vld [vmem:[#allocation2] sm:$0xff]
    %v31 = vld [vmem:[#allocation2 + $0x8] sm:$0xff]
    %v32 = vld [vmem:[#allocation2 + $0x10] sm:$0xff]
    %v33 = vld [vmem:[#allocation2 + $0x18] sm:$0xff]
    %v34 = vld [vmem:[#allocation2 + $0x20] sm:$0xff]
    %v35 = vld [vmem:[#allocation2 + $0x28] sm:$0xff]
    %v36 = vld [vmem:[#allocation2 + $0x30] sm:$0xff]
    %v37 = vld [vmem:[#allocation2 + $0x38] sm:$0xff]
    %v38 = vld [vmem:[#allocation2 + $0x40] sm:$0xff]
    %v39 = vld [vmem:[#allocation2 + $0x48] sm:$0xff]
    %v40 = vld [vmem:[#allocation2 + $0x50] sm:$0xff]
    %v41 = vld [vmem:[#allocation2 + $0x58] sm:$0xff]
    %v42 = vld [vmem:[#allocation2 + $0x60] sm:$0xff]
    %v43 = vld [vmem:[#allocation2 + $0x68] sm:$0xff]
    %v44 = vld [vmem:[#allocation2 + $0x70] sm:$0xff]
    %v45 = vld [vmem:[#allocation2 + $0x78] sm:$0xff]
    %v46 = vld [vmem:[%s2] sm:$0x1]
    %v48 = vlaneseq
    %v49 = vshrl.u32 %v48, 7
    %v50 = vsub.s32 0, %v49
    %v51 = vrot.slane %v46, %v50
    %53 = vmatprep.subr.mxu0 0.0
    %54 = vmatpush1.msra.mxu0 %v45
    %55 = vmatprep.subr.mxu0 0.0
    %56 = vmatpush1.msra.mxu0 %v44
    %57 = vmatprep.subr.mxu0 0.0
    %58 = vmatpush1.msra.mxu0 %v43
    %59 = vmatprep.subr.mxu0 0.0
    %60 = vmatpush1.msra.mxu0 %v42
    %61 = vmatprep.subr.mxu0 0.0
    %62 = vmatpush1.msra.mxu0 %v41
    %63 = vmatprep.subr.mxu0 0.0
    %64 = vmatpush1.msra.mxu0 %v40
    %65 = vmatprep.subr.mxu0 0.0
    %66 = vmatpush1.msra.mxu0 %v39
    %67 = vmatprep.subr.mxu0 0.0
    %68 = vmatpush1.msra.mxu0 %v38
    %69 = vmatprep.subr.mxu0 0.0
    %70 = vmatpush1.msra.mxu0 %v37
    %71 = vmatprep.subr.mxu0 0.0
    %72 = vmatpush1.msra.mxu0 %v36
    %73 = vmatprep.subr.mxu0 0.0
    %74 = vmatpush1.msra.mxu0 %v35
    %75 = vmatprep.subr.mxu0 0.0
    %76 = vmatpush1.msra.mxu0 %v34
    %77 = vmatprep.subr.mxu0 0.0
    %78 = vmatpush1.msra.mxu0 %v33
    %79 = vmatprep.subr.mxu0 0.0
    %80 = vmatpush1.msra.mxu0 %v32
    %81 = vmatprep.subr.mxu0 0.0
    %82 = vmatpush1.msra.mxu0 %v31
    %83 = vmatprep.subr.mxu0 0.0
    %84 = vmatpush1.msra.mxu0 %v30
    %85 = vmatprep.subr.mxu0 0.0
    %86 = vmatpush2.msra.mxu0 0.0
    %87 = vmatprep.subr.mxu0 0.0
    %88 = vmatpush2.msra.mxu0 0.0
    %89 = vmatprep.subr.mxu0 0.0
    %90 = vmatpush2.msra.mxu0 0.0
    %91 = vmatprep.subr.mxu0 0.0
    %92 = vmatpush2.msra.mxu0 0.0
    %93 = vmatprep.subr.mxu0 0.0
    %94 = vmatpush2.msra.mxu0 0.0
    %95 = vmatprep.subr.mxu0 0.0
    %96 = vmatpush2.msra.mxu0 0.0
    %97 = vmatprep.subr.mxu0 0.0
    %98 = vmatpush2.msra.mxu0 0.0
    %99 = vmatprep.subr.mxu0 0.0
    %100 = vmatpush2.msra.mxu0 0.0
    %101 = vmatprep.subr.mxu0 0.0
    %102 = vmatpush2.msra.mxu0 0.0
    %103 = vmatprep.subr.mxu0 0.0
    %104 = vmatpush2.msra.mxu0 0.0
    %105 = vmatprep.subr.mxu0 0.0
    %106 = vmatpush2.msra.mxu0 0.0
    %107 = vmatprep.subr.mxu0 0.0
    %108 = vmatpush2.msra.mxu0 0.0
    %109 = vmatprep.subr.mxu0 0.0
    %110 = vmatpush2.msra.mxu0 0.0
    %111 = vmatprep.subr.mxu0 0.0
    %112 = vmatpush2.msra.mxu0 0.0
    %113 = vmatprep.subr.mxu0 0.0
    %114 = vmatpush2.msra.mxu0 0.0
    %115 = vmatprep.subr.mxu0 0.0
    %116 = vmatpush2.msra.mxu0 0.0
    %117 = vmatprep.mubr.f32.mxu0 0.0
    %118 = vmatmul.mubr.f32.gmra.mxu0 %v28
    %v119 = vpop.f32.mrf.mxu0
    %v120 = vadd.f32 %v51, %v119
    %v121 = vpop.f32.mrf.mxu0
    %122 = vmatprep.mubr.f32.mxu0 0.0
    %123 = vmatmul.mubr.f32.gmra.mxu0 %v29
    %v124 = vpop.f32.mrf.mxu0
    %v125 = vadd.f32 %v51, %v124
    %v126 = vpop.f32.mrf.mxu0
    %127 = vdwg.mxu0
    %128 = vst [vmem:[%s3] sm:$0xff] %v120
    %129 = vst [vmem:[%s3 + $0x8] sm:$0xff] %v125
    // Predicated region
    $region18: #{classification_head.1} parent=1 // pred_check
      _
    $region19: #{classification_head.1} parent=1 // pred_check_branch
      %131 = sbr.rel (0) target = $region21
    $region20: #{classification_head.1} parent=1 // pred_region
      _
    $region21: #{classification_head.1} parent=1 // pred_fallthru
      _
    // Predicated region
    $region22: #{classification_head.1} parent=1 // pred_check
      _
    $region23: #{classification_head.1} parent=1 // pred_check_branch
      %133 = sbr.rel (0) target = $region25
    $region24: #{classification_head.1} parent=1 // pred_region
      _
    $region25: #{classification_head.1} parent=1 // pred_fallthru
      _
    %134 = vsyncpa [#allocation3], 1

</llo_original>
